<compile_context>
chip_gen: v7x
topology: tpu7x:2x2x1
jax: 0.10.0
libtpu: 0.0.40
codegen_flags: <defaults>
</compile_context>

<pallas_src>
import functools

import jax
import jax.numpy as jnp
from jax.experimental import pallas as pl
from jax.experimental.pallas import tpu as pltpu


# ---------------------------------------------------------------------------
# Kernels
# ---------------------------------------------------------------------------

def _se_fused_kernel(x_ref, w1t_ref, w2t_ref, o_ref, *, inv_hw):
    """Fused SE for a block of B whole batches.

    x_ref: (B, C, HW) input dtype; w1t_ref: (C, Cr) = fc1.T; w2t_ref: (Cr, C) = fc2.T;
    o_ref: (B, C, HW).
    """
    # Squeeze: global average pool over the lane (spatial) axis, f32 accumulate.
    pooled = jnp.sum(x_ref[...].astype(jnp.float32), axis=-1) * inv_hw      # (B, C)
    # Excite: fc1 -> ReLU -> fc2 -> sigmoid as batched matmuls (1x1 convs on 1x1 map).
    h = jnp.maximum(
        jnp.dot(pooled, w1t_ref[...], preferred_element_type=jnp.float32), 0.0)  # (B, Cr)
    s = jnp.dot(h, w2t_ref[...], preferred_element_type=jnp.float32)             # (B, C)
    scale = jax.nn.sigmoid(s).astype(o_ref.dtype)                                # (B, C)
    # Scale: second (native-dtype) read of x; broadcast gate over lanes.
    o_ref[...] = x_ref[...] * scale[:, :, None]


def _se_pool_kernel(x_ref, pooled_ref, *, inv_hw):
    """Pass 1 of the two-pass path: per-channel-tile global mean.

    x_ref: (1, Ct, HW); pooled_ref: (1, Ct, 1) f32.
    """
    pooled_ref[0] = jnp.sum(x_ref[0].astype(jnp.float32), axis=-1,
                            keepdims=True) * inv_hw


def _se_excite_scale_kernel(x_ref, pooled_ref, w1_ref, w2c_ref, o_ref):
    """Pass 2 of the two-pass path: excite (tiny, recomputed per tile) + scale.

    x_ref: (1, Ct, HW); pooled_ref: (1, C, 1) f32 (full channel vector);
    w1_ref: (Cr, C); w2c_ref: (Ct, Cr) = this tile's rows of fc2; o_ref: (1, Ct, HW).
    """
    pooled = pooled_ref[0]                                                  # (C, 1)
    h = jnp.maximum(
        jnp.dot(w1_ref[...], pooled, preferred_element_type=jnp.float32), 0.0)  # (Cr, 1)
    s = jnp.dot(w2c_ref[...], h, preferred_element_type=jnp.float32)             # (Ct, 1)
    scale = jax.nn.sigmoid(s).astype(o_ref.dtype)                                # (Ct, 1)
    o_ref[0] = x_ref[0] * scale


# ---------------------------------------------------------------------------
# Budget / tiling helpers
# ---------------------------------------------------------------------------

def _vmem_capacity_bytes():
    """Physical VMEM per core; conservative 64 MiB (v7x-like) if the query fails."""
    try:
        return int(pltpu.get_tpu_info().vmem_capacity_bytes)
    except Exception:  # introspection unavailable -> be conservative
        return 64 << 20


def _vmem_limit(requested, vmem_cap):
    """Scoped VMEM limit: cover `requested`, keep >=8 MiB headroom below physical."""
    return int(max(32 << 20, min(requested, vmem_cap - (8 << 20))))


def _pick_batch_tile(n, per_batch_bytes, budget, min_grid=1):
    """Largest divisor B of n with B*per_batch_bytes <= budget and n//B >= min_grid."""
    best = 1
    for b in range(1, n + 1):
        if n % b != 0:
            continue
        if b * per_batch_bytes > budget or (n // b) < min_grid:
            break
        best = b
    return best


def _pick_c_tile(c, hw, itemsize, max_block_bytes, want_splits=1):
    """Largest multiple-of-8 divisor of C whose (Ct, HW) block fits the budget."""
    cands = [d for d in range(8, c + 1, 8) if c % d == 0]
    if not cands:
        # TODO(synk): C has no multiple-of-8 divisor; fall back to a full-C block.
        return c
    fitting = [d for d in cands
               if d * hw * itemsize <= max_block_bytes and (c // d) >= want_splits]
    if fitting:
        return max(fitting)
    return cands[0]   # smallest legal tile; caller raises vmem_limit to match


# ---------------------------------------------------------------------------
# Wrapper
# ---------------------------------------------------------------------------

def se_module_pallas(x_nchw, w1, w2, *, force_two_pass=False, c_tile=None):
    """SEModule forward.

    Args:
      x_nchw: (N, C, H, W) input.
      w1: fc1 weight (C//r, C)   (Conv2d 1x1 weight squeezed).
      w2: fc2 weight (C, C//r).
      force_two_pass: force the two-pass (channel-tiled) path (for testing).
      c_tile: optional explicit channel tile for the two-pass path.
    Returns:
      (N, C, H, W), same dtype as x.
    """
    N, C, H, W = x_nchw.shape
    Cr = w1.shape[0]
    HW = H * W
    itemsize = jnp.dtype(x_nchw.dtype).itemsize

    # Free reshape (contiguous), no HBM traffic.
    x = x_nchw.reshape(N, C, HW)

    vmem_cap = _vmem_capacity_bytes()
    small_vmem = vmem_cap <= (96 << 20)      # v7x (64 MiB) or unknown generation
    if small_vmem:
        fused_budget, two_pass_budget = 10 << 20, 6 << 20
    else:                                     # v5e / v6e: 128 MiB physical VMEM
        fused_budget, two_pass_budget = 24 << 20, 8 << 20

    per_batch_bytes = C * HW * itemsize
    total_bytes = N * per_batch_bytes
    weight_bytes = int((w1.size + w2.size) * jnp.dtype(w1.dtype).itemsize)

    use_two_pass = force_two_pass or per_batch_bytes > fused_budget
    # On 2-TensorCore chips (v7x), an N == 1 fused call pins all work to one core;
    # route large single-image inputs to the fully-parallel two-pass path instead.
    if (not use_two_pass) and small_vmem and N == 1 and per_batch_bytes > (4 << 20):
        probe = _pick_c_tile(C, HW, itemsize, two_pass_budget, want_splits=2)
        if C // probe >= 2:
            use_two_pass = True

    if not use_two_pass:
        # ---- Fused single-pass path: 2x HBM traffic (read + write) ----
        min_grid = 2 if (small_vmem and N >= 2 and total_bytes > (2 << 20)) else 1
        B = _pick_batch_tile(N, per_batch_bytes, fused_budget, min_grid=min_grid)
        blk_bytes = B * per_batch_bytes
        out = pl.pallas_call(
            functools.partial(_se_fused_kernel, inv_hw=1.0 / HW),
            out_shape=jax.ShapeDtypeStruct((N, C, HW), x.dtype),
            grid_spec=pltpu.PrefetchScalarGridSpec(
                num_scalar_prefetch=0,
                grid=(N // B,),
                in_specs=[
                    pl.BlockSpec((B, C, HW), lambda i: (i, 0, 0)),
                    pl.BlockSpec((C, Cr), lambda i: (0, 0)),     # fc1.T
                    pl.BlockSpec((Cr, C), lambda i: (0, 0)),     # fc2.T
                ],
                out_specs=pl.BlockSpec((B, C, HW), lambda i: (i, 0, 0)),
            ),
            compiler_params=pltpu.CompilerParams(
                dimension_semantics=("parallel",),
                vmem_limit_bytes=_vmem_limit(
                    4 * blk_bytes + 2 * weight_bytes + (8 << 20), vmem_cap)),
            cost_estimate=pl.CostEstimate(
                flops=int(N * C * (2 * HW + 4 * Cr)),
                transcendentals=int(N * C),
                bytes_accessed=int(2 * total_bytes + weight_bytes)),
        )(x, w1.T, w2.T)
        return out.reshape(N, C, H, W)

    # ---- Two-pass channel-tiled path (single batch too big / v7x N==1) ----
    if c_tile is None:
        want = 2 if (small_vmem and N == 1) else 1
        c_tile = _pick_c_tile(C, HW, itemsize, two_pass_budget, want_splits=want)
    else:
        assert C % c_tile == 0 and (c_tile % 8 == 0 or c_tile == C), "bad c_tile"
    n_c = C // c_tile
    blk_bytes = c_tile * HW * itemsize

    # Pass 1: per-channel-tile global mean (fully parallel grid, no accumulator).
    pooled = pl.pallas_call(
        functools.partial(_se_pool_kernel, inv_hw=1.0 / HW),
        out_shape=jax.ShapeDtypeStruct((N, C, 1), jnp.float32),
        grid_spec=pltpu.PrefetchScalarGridSpec(
            num_scalar_prefetch=0,
            grid=(N, n_c),
            in_specs=[pl.BlockSpec((1, c_tile, HW), lambda n, c: (n, c, 0))],
            out_specs=pl.BlockSpec((1, c_tile, 1), lambda n, c: (n, c, 0)),
        ),
        compiler_params=pltpu.CompilerParams(
            dimension_semantics=("parallel", "parallel"),
            vmem_limit_bytes=_vmem_limit(2 * blk_bytes + (8 << 20), vmem_cap)),
        cost_estimate=pl.CostEstimate(
            flops=int(N * C * HW), transcendentals=0,
            bytes_accessed=int(total_bytes + N * C * 4)),
    )(x)

    # Pass 2: excite (tiny, recomputed per tile) + per-channel scale, fully parallel.
    out = pl.pallas_call(
        _se_excite_scale_kernel,
        out_shape=jax.ShapeDtypeStruct((N, C, HW), x.dtype),
        grid_spec=pltpu.PrefetchScalarGridSpec(
            num_scalar_prefetch=0,
            grid=(N, n_c),
            in_specs=[
                pl.BlockSpec((1, c_tile, HW), lambda n, c: (n, c, 0)),  # x tile
                pl.BlockSpec((1, C, 1), lambda n, c: (n, 0, 0)),        # pooled, full C
                pl.BlockSpec((Cr, C), lambda n, c: (0, 0)),             # fc1 (full)
                pl.BlockSpec((c_tile, Cr), lambda n, c: (c, 0)),        # fc2 row tile
            ],
            out_specs=pl.BlockSpec((1, c_tile, HW), lambda n, c: (n, c, 0)),
        ),
        compiler_params=pltpu.CompilerParams(
            dimension_semantics=("parallel", "parallel"),
            vmem_limit_bytes=_vmem_limit(
                4 * blk_bytes + 2 * weight_bytes + (8 << 20), vmem_cap)),
        cost_estimate=pl.CostEstimate(
            flops=int(N * C * HW + 2 * N * n_c * Cr * (C + c_tile)),
            transcendentals=int(N * C),
            bytes_accessed=int(2 * total_bytes + N * C * 4 + weight_bytes)),
    )(x, pooled, w1, w2)
    return out.reshape(N, C, H, W)


def se_module_ref(x_nchw, w1, w2):
    """Pure-JAX reference matching the PyTorch forward."""
    pooled = jnp.mean(x_nchw.astype(jnp.float32), axis=(2, 3))        # (N, C)
    h = jnp.maximum(pooled @ w1.astype(jnp.float32).T, 0.0)           # (N, Cr)
    s = jax.nn.sigmoid(h @ w2.astype(jnp.float32).T)                  # (N, C)
    return (x_nchw.astype(jnp.float32) * s[:, :, None, None]).astype(x_nchw.dtype)


if __name__ == "__main__":
    key = jax.random.PRNGKey(0)

    # --- Test 1: module config channels=4, reduction=2; input (2, 4, 16, 16).
    # Small -> fused single-pass path with batch packing.
    N, C, H, W = 2, 4, 16, 16
    Cr = C // 2
    kx, k1, k2, key = jax.random.split(key, 4)
    x = jax.random.normal(kx, (N, C, H, W), dtype=jnp.float32)
    w1 = 0.1 * jax.random.normal(k1, (Cr, C), dtype=jnp.float32)  # fc1 (Cr,C,1,1)->(Cr,C)
    w2 = 0.1 * jax.random.normal(k2, (C, Cr), dtype=jnp.float32)  # fc2 (C,Cr,1,1)->(C,Cr)

    out = jax.block_until_ready(se_module_pallas(x, w1, w2))
    ref = se_module_ref(x, w1, w2)
    assert out.shape == (N, C, H, W)
    assert jnp.allclose(out, ref, atol=1e-5, rtol=1e-5), "fused path mismatch"

    # --- Test 2: exercise the two-pass channel-tiled path (forced, small shapes).
    N2, C2, H2, W2 = 2, 16, 16, 16     # C=16, c_tile=8 -> 2 channel tiles
    Cr2 = C2 // 4
    kx2, k3, k4, key = jax.random.split(key, 4)
    x2 = jax.random.normal(kx2, (N2, C2, H2, W2), dtype=jnp.float32)
    w1b = 0.1 * jax.random.normal(k3, (Cr2, C2), dtype=jnp.float32)
    w2b = 0.1 * jax.random.normal(k4, (C2, Cr2), dtype=jnp.float32)

    out2 = jax.block_until_ready(
        se_module_pallas(x2, w1b, w2b, force_two_pass=True, c_tile=8))
    ref2 = se_module_ref(x2, w1b, w2b)
    assert out2.shape == (N2, C2, H2, W2)
    assert jnp.allclose(out2, ref2, atol=1e-5, rtol=1e-5), "two-pass path mismatch"

    # --- Test 3: bf16 input through the fused path (native-dtype scale multiply,
    # several batches packed per grid step).
    N3, C3, H3, W3 = 4, 8, 8, 8
    Cr3 = C3 // 2
    kx3, k5, k6, key = jax.random.split(key, 4)
    x3 = jax.random.normal(kx3, (N3, C3, H3, W3), dtype=jnp.float32).astype(jnp.bfloat16)
    w1c = (0.1 * jax.random.normal(k5, (Cr3, C3), dtype=jnp.float32)).astype(jnp.bfloat16)
    w2c = (0.1 * jax.random.normal(k6, (C3, Cr3), dtype=jnp.float32)).astype(jnp.bfloat16)

    out3 = jax.block_until_ready(se_module_pallas(x3, w1c, w2c))
    ref3 = se_module_ref(x3, w1c, w2c)
    assert out3.shape == (N3, C3, H3, W3)
    assert jnp.allclose(out3.astype(jnp.float32), ref3.astype(jnp.float32),
                        atol=5e-2, rtol=5e-2), "bf16 fused path mismatch"

    print("KERNEL_OK")
</pallas_src>

<mosaic_0001>
module attributes {stable_mosaic.version = 11 : i64} {
  func.func @_se_fused_kernel(%arg0: i32, %arg1: memref<2x4x256xf32, #tpu.memory_space<vmem>>, %arg2: memref<4x2xf32, #tpu.memory_space<vmem>>, %arg3: memref<2x4xf32, #tpu.memory_space<vmem>>, %arg4: memref<2x4x256xf32, #tpu.memory_space<vmem>>) attributes {dimension_semantics = [#tpu.dimension_semantics<parallel>], iteration_bounds = array<i64: 1>, scalar_prefetch = 0 : i64, scratch_operands = 0 : i64, tpu.core_type = #tpu.core_type<tc>, window_params = [{transform_indices = @transform_0, window_bounds = array<i64: 2, 4, 256>}, {pipeline_mode = #tpu.pipeline_mode<synchronous>, transform_indices = @transform_1, window_bounds = array<i64: 4, 2>}, {pipeline_mode = #tpu.pipeline_mode<synchronous>, transform_indices = @transform_2, window_bounds = array<i64: 2, 4>}, {transform_indices = @transform_3, window_bounds = array<i64: 2, 4, 256>}]} {
    %c0 = arith.constant 0 : index
    %c0_0 = arith.constant 0 : index
    %c0_1 = arith.constant 0 : index
    %0 = vector.load %arg1[%c0, %c0_0, %c0_1] : memref<2x4x256xf32, #tpu.memory_space<vmem>>, vector<2x4x256xf32>
    %cst = arith.constant dense<0.000000e+00> : vector<2x4xf32>
    %1 = vector.multi_reduction <add>, %0, %cst [2] : vector<2x4x256xf32> to vector<2x4xf32>
    %cst_2 = arith.constant 3.906250e-03 : f32
    %2 = vector.broadcast %cst_2 : f32 to vector<2x4xf32>
    %3 = arith.mulf %1, %2 : vector<2x4xf32>
    %c0_3 = arith.constant 0 : index
    %c0_4 = arith.constant 0 : index
    %4 = vector.load %arg2[%c0_3, %c0_4] : memref<4x2xf32, #tpu.memory_space<vmem>>, vector<4x2xf32>
    %cst_5 = arith.constant dense<0.000000e+00> : vector<2x2xf32>
    %5 = tpu.matmul %3, %4, %cst_5 {dimension_numbers = #tpu.dot_dimension_numbers<[1], [0], [0], [1], [0, 0, 1, 1], [], []>} : vector<2x4xf32>, vector<4x2xf32>, vector<2x2xf32> -> vector<2x2xf32>
    %cst_6 = arith.constant 0.000000e+00 : f32
    %6 = vector.broadcast %cst_6 : f32 to vector<2x2xf32>
    %7 = arith.maximumf %5, %6 : vector<2x2xf32>
    %c0_7 = arith.constant 0 : index
    %c0_8 = arith.constant 0 : index
    %8 = vector.load %arg3[%c0_7, %c0_8] : memref<2x4xf32, #tpu.memory_space<vmem>>, vector<2x4xf32>
    %cst_9 = arith.constant dense<0.000000e+00> : vector<2x4xf32>
    %9 = tpu.matmul %7, %8, %cst_9 {dimension_numbers = #tpu.dot_dimension_numbers<[1], [0], [0], [1], [0, 0, 1, 1], [], []>} : vector<2x2xf32>, vector<2x4xf32>, vector<2x4xf32> -> vector<2x4xf32>
    %10 = arith.negf %9 : vector<2x4xf32>
    %11 = math.exp %10 : vector<2x4xf32>
    %cst_10 = arith.constant 1.000000e+00 : f32
    %12 = vector.broadcast %cst_10 : f32 to vector<2x4xf32>
    %13 = arith.addf %12, %11 : vector<2x4xf32>
    %14 = arith.divf %12, %13 : vector<2x4xf32>
    %c0_11 = arith.constant 0 : index
    %c0_12 = arith.constant 0 : index
    %c0_13 = arith.constant 0 : index
    %15 = vector.load %arg1[%c0_11, %c0_12, %c0_13] : memref<2x4x256xf32, #tpu.memory_space<vmem>>, vector<2x4x256xf32>
    %16 = vector.shape_cast %14 : vector<2x4xf32> to vector<2x4x1xf32>
    %17 = vector.broadcast %16 : vector<2x4x1xf32> to vector<2x4x256xf32>
    %18 = arith.mulf %15, %17 : vector<2x4x256xf32>
    %c0_14 = arith.constant 0 : index
    %c0_15 = arith.constant 0 : index
    %c0_16 = arith.constant 0 : index
    %19 = vector.load %arg4[%c0_14, %c0_15, %c0_16] : memref<2x4x256xf32, #tpu.memory_space<vmem>>, vector<2x4x256xf32>
    tpu.vector_store %arg4[%c0_14, %c0_15, %c0_16], %18 {strides = array<i32>} : memref<2x4x256xf32, #tpu.memory_space<vmem>>, vector<2x4x256xf32>,
    return
  }
  func.func @transform_0(%arg0: i32) -> (i32, i32, i32) {
    %c0_i32 = arith.constant 0 : i32
    %c0_i32_0 = arith.constant 0 : i32
    %c0_i32_1 = arith.constant 0 : i32
    return %arg0, %c0_i32, %c0_i32_0 : i32, i32, i32
  }
  func.func @transform_1(%arg0: i32) -> (i32, i32) {
    %c0_i32 = arith.constant 0 : i32
    %c0_i32_0 = arith.constant 0 : i32
    %c0_i32_1 = arith.constant 0 : i32
    return %c0_i32, %c0_i32_0 : i32, i32
  }
  func.func @transform_2(%arg0: i32) -> (i32, i32) {
    %c0_i32 = arith.constant 0 : i32
    %c0_i32_0 = arith.constant 0 : i32
    %c0_i32_1 = arith.constant 0 : i32
    return %c0_i32, %c0_i32_0 : i32, i32
  }
  func.func @transform_3(%arg0: i32) -> (i32, i32, i32) {
    %c0_i32 = arith.constant 0 : i32
    %c0_i32_0 = arith.constant 0 : i32
    %c0_i32_1 = arith.constant 0 : i32
    return %arg0, %c0_i32, %c0_i32_0 : i32, i32, i32
  }
}

</mosaic_0001>

<llo_original>
// kernel: tpu_custom_call.1
$region0: #{tpu_custom_call.1}
  #allocation0 [shape = 'u32[]', space=smem, size = 0x4, offset = 0x4, fixed_abs, tag = 'smem constant byte address 0x4 - core index']
  #allocation1 [shape = 'u32[144,128]{1,0:T(1,128)}', space=vmem, size = 0x12000, scoped, tag = 'internal scratch']
  %s0 = inlined_call_operand.hbm [shape: f32[2,4,256], index: 0, kind: input, shape index: {}]
  %s1 = inlined_call_operand.vmem [shape: f32[4,2], index: 1, kind: input, shape index: {}]
  %s2 = inlined_call_operand.vmem [shape: f32[2,4], index: 2, kind: input, shape index: {}]
  %s3 = inlined_call_operand.hbm [shape: f32[2,4,256], index: 3, kind: output, shape index: {}]
  %s4 = sld [smem:[#allocation0]]
  $region26: #{tpu_custom_call.1} parent=0
    _
  %s6 = ssub.s32 1, %s4
  %s7 = scalar_select 0, %s6, %s4
  $region1: #{tpu_custom_call.1} parent=0
    #allocation2 [shape = 'u8[8192]{0}', space=vmem, size = 0x2000, scoped, tag = 'input window, operand 0, single buffered']
    #allocation3 [shape = 's32[1]{0}', space=sflag, size = 0x4, scoped, tag = 'scoped memory for tpu_custom_call.1']
    #allocation4 [shape = 's32[1]{0}', space=sflag, size = 0x4, scoped, tag = 'scoped memory for tpu_custom_call.1']
    #allocation5 [shape = 'u8[8192]{0}', space=vmem, size = 0x2000, scoped, tag = 'output window, operand 0, single buffered']
    %8 = vsyncpa [#allocation3], 0
    %9 = vsyncpa [#allocation4], 0
    // Predicated region
    $region2: #{tpu_custom_call.1} parent=1 // pred_check
      _
    $region3: #{tpu_custom_call.1} parent=1 // pred_check_branch
      %11 = sbr.rel (0) target = $region5
    $region4: #{tpu_custom_call.1} parent=1 // pred_region
      %s13 = ssub.s32 256, 256
      %14 = vsyncadd [#allocation3], %s13
      %s15 = sshll.u32 [#allocation2], 4
      %s16 = int_to_ptr.vmem [resolvable:$true] %s15
      %21 = dma.hbm_to_vmem [thread:$0]  %s0, 256, %s16, [#allocation3], 128, 128, 8
    $region5: #{tpu_custom_call.1} parent=1 // pred_fallthru
      _
    // Predicated region
    $region6: #{tpu_custom_call.1} parent=1 // pred_check
      _
    $region7: #{tpu_custom_call.1} parent=1 // pred_check_branch
      %23 = sbr.rel (0) target = $region9
    $region8: #{tpu_custom_call.1} parent=1 // pred_region
      _
    $region9: #{tpu_custom_call.1} parent=1 // pred_fallthru
      _
    // Predicated region
    $region10: #{tpu_custom_call.1} parent=1 // pred_check
      _
    $region11: #{tpu_custom_call.1} parent=1 // pred_check_branch
      %25 = sbr.rel (0) target = $region13
    $region12: #{tpu_custom_call.1} parent=1 // pred_region
      _
    $region13: #{tpu_custom_call.1} parent=1 // pred_fallthru
      _
    // Predicated region
    $region14: #{tpu_custom_call.1} parent=1 // pred_check
      _
    $region15: #{tpu_custom_call.1} parent=1 // pred_check_branch
      %27 = sbr.rel (0) target = $region17
    $region16: #{tpu_custom_call.1} parent=1 // pred_region
      %28 = dma.done [#allocation3], 256
    $region17: #{tpu_custom_call.1} parent=1 // pred_fallthru
      _
    %v29 = vld [vmem:[#allocation2] sm:$0xff]
    %v30 = vld [vmem:[#allocation2 + $0x8] sm:$0xff]
    %v33 = vcombine.high %v29, %v29
    %v34 = vcombine.high %v30, %v30
    %vm37 = vcmask 1043456
    %v38 = vsel %vm37, %v29, 0.0
    %v39 = vsel %vm37, %v33, 0.0
    %v40 = vadd.f32 %v38, %v39
    %41 = vadd.xlane.f32.xlu0 %v40
    %v42 = vpop.xlane.xlu0 %41
    %v43 = vsel %vm37, %v30, 0.0
    %v44 = vsel %vm37, %v34, 0.0
    %v45 = vadd.f32 %v43, %v44
    %46 = vadd.xlane.f32.xlu0 %v45
    %v47 = vpop.xlane.xlu0 %46
    %v48 = vmul.f32 %v42, 0.00390625
    %v49 = vmul.f32 %v47, 0.00390625
    %v50 = vld [vmem:[%s1] sm:$0xf]
    %v53 = vlaneseq
    %v54 = vand.u32 %v53, 127
    %v55 = vlaneseq
    %v56 = vshrl.u32 %v55, 7
    %v57 = vsub.s32 %v54, %v56
    %v58 = vrot.slane %v48, %v57
    %v59 = vlaneseq
    %v60 = vshrl.u32 %v59, 7
    %v61 = vsub.s32 %v54, %v60
    %v62 = vrot.slane %v49, %v61
    %vm63 = vcmask 1041409
    %v64 = vsel %vm63, %v62, %v58
    %vm65 = vcmask 31744
    %v66 = vsel %vm65, %v64, 0
    %v69 = vsel %vm37, %v50, 0
    %71 = vmatprep.subr.mxu0 0.0
    %72 = vmatpush1.msra.mxu0 %v69
    %73 = vmatprep.subr.mxu0 0.0
    %74 = vmatpush1.msra.mxu0 0.0
    %75 = vmatprep.subr.mxu0 0.0
    %76 = vmatpush1.msra.mxu0 0.0
    %77 = vmatprep.subr.mxu0 0.0
    %78 = vmatpush1.msra.mxu0 0.0
    %79 = vmatprep.subr.mxu0 0.0
    %80 = vmatpush1.msra.mxu0 0.0
    %81 = vmatprep.subr.mxu0 0.0
    %82 = vmatpush1.msra.mxu0 0.0
    %83 = vmatprep.subr.mxu0 0.0
    %84 = vmatpush1.msra.mxu0 0.0
    %85 = vmatprep.subr.mxu0 0.0
    %86 = vmatpush1.msra.mxu0 0.0
    %87 = vmatprep.subr.mxu0 0.0
    %88 = vmatpush1.msra.mxu0 0.0
    %89 = vmatprep.subr.mxu0 0.0
    %90 = vmatpush1.msra.mxu0 0.0
    %91 = vmatprep.subr.mxu0 0.0
    %92 = vmatpush1.msra.mxu0 0.0
    %93 = vmatprep.subr.mxu0 0.0
    %94 = vmatpush1.msra.mxu0 0.0
    %95 = vmatprep.subr.mxu0 0.0
    %96 = vmatpush1.msra.mxu0 0.0
    %97 = vmatprep.subr.mxu0 0.0
    %98 = vmatpush1.msra.mxu0 0.0
    %99 = vmatprep.subr.mxu0 0.0
    %100 = vmatpush1.msra.mxu0 0.0
    %101 = vmatprep.subr.mxu0 0.0
    %102 = vmatpush1.msra.mxu0 0.0
    %103 = vmatprep.subr.mxu0 0.0
    %104 = vmatpush1.msra.mxu0 0.0
    %105 = vmatprep.subr.mxu0 0.0
    %106 = vmatpush1.msra.mxu0 0.0
    %107 = vmatprep.subr.mxu0 0.0
    %108 = vmatpush1.msra.mxu0 0.0
    %109 = vmatprep.subr.mxu0 0.0
    %110 = vmatpush1.msra.mxu0 0.0
    %111 = vmatprep.subr.mxu0 0.0
    %112 = vmatpush1.msra.mxu0 0.0
    %113 = vmatprep.subr.mxu0 0.0
    %114 = vmatpush1.msra.mxu0 0.0
    %115 = vmatprep.subr.mxu0 0.0
    %116 = vmatpush1.msra.mxu0 0.0
    %117 = vmatprep.subr.mxu0 0.0
    %118 = vmatpush1.msra.mxu0 0.0
    %119 = vmatprep.subr.mxu0 0.0
    %120 = vmatpush1.msra.mxu0 0.0
    %121 = vmatprep.subr.mxu0 0.0
    %122 = vmatpush1.msra.mxu0 0.0
    %123 = vmatprep.subr.mxu0 0.0
    %124 = vmatpush1.msra.mxu0 0.0
    %125 = vmatprep.subr.mxu0 0.0
    %126 = vmatpush1.msra.mxu0 0.0
    %127 = vmatprep.subr.mxu0 0.0
    %128 = vmatpush1.msra.mxu0 0.0
    %129 = vmatprep.subr.mxu0 0.0
    %130 = vmatpush1.msra.mxu0 0.0
    %131 = vmatprep.subr.mxu0 0.0
    %132 = vmatpush1.msra.mxu0 0.0
    %133 = vmatprep.subr.mxu0 0.0
    %134 = vmatpush1.msra.mxu0 0.0
    %135 = vmatprep.mubr.f32.mxu0 0.0
    %136 = vmatmul.mubr.f32.gmra.mrb[0].mxu0 %v66
    %v137 = vpop.f32.mrb[0].mxu0
    %v138 = vadd.f32 0.0, %v137
    %v139 = vpop.f32.mrb[0].mxu0
    %140 = vdwg.mxu0
    %v141 = vmax.f32 %v138, 0.0
    %v142 = vld [vmem:[%s2] sm:$0x3]
    %vm143 = vcmask 15360
    %v145 = vsel %vm143, %v141, 0
    %vm147 = vcmask 1041408
    %v149 = vsel %vm147, %v142, 0
    %151 = vmatprep.subr.mxu0 0.0
    %152 = vmatpush1.msra.mxu0 %v149
    %153 = vmatprep.subr.mxu0 0.0
    %154 = vmatpush1.msra.mxu0 0.0
    %155 = vmatprep.subr.mxu0 0.0
    %156 = vmatpush1.msra.mxu0 0.0
    %157 = vmatprep.subr.mxu0 0.0
    %158 = vmatpush1.msra.mxu0 0.0
    %159 = vmatprep.subr.mxu0 0.0
    %160 = vmatpush1.msra.mxu0 0.0
    %161 = vmatprep.subr.mxu0 0.0
    %162 = vmatpush1.msra.mxu0 0.0
    %163 = vmatprep.subr.mxu0 0.0
    %164 = vmatpush1.msra.mxu0 0.0
    %165 = vmatprep.subr.mxu0 0.0
    %166 = vmatpush1.msra.mxu0 0.0
    %167 = vmatprep.subr.mxu0 0.0
    %168 = vmatpush1.msra.mxu0 0.0
    %169 = vmatprep.subr.mxu0 0.0
    %170 = vmatpush1.msra.mxu0 0.0
    %171 = vmatprep.subr.mxu0 0.0
    %172 = vmatpush1.msra.mxu0 0.0
    %173 = vmatprep.subr.mxu0 0.0
    %174 = vmatpush1.msra.mxu0 0.0
    %175 = vmatprep.subr.mxu0 0.0
    %176 = vmatpush1.msra.mxu0 0.0
    %177 = vmatprep.subr.mxu0 0.0
    %178 = vmatpush1.msra.mxu0 0.0
    %179 = vmatprep.subr.mxu0 0.0
    %180 = vmatpush1.msra.mxu0 0.0
    %181 = vmatprep.subr.mxu0 0.0
    %182 = vmatpush1.msra.mxu0 0.0
    %183 = vmatprep.subr.mxu0 0.0
    %184 = vmatpush1.msra.mxu0 0.0
    %185 = vmatprep.subr.mxu0 0.0
    %186 = vmatpush1.msra.mxu0 0.0
    %187 = vmatprep.subr.mxu0 0.0
    %188 = vmatpush1.msra.mxu0 0.0
    %189 = vmatprep.subr.mxu0 0.0
    %190 = vmatpush1.msra.mxu0 0.0
    %191 = vmatprep.subr.mxu0 0.0
    %192 = vmatpush1.msra.mxu0 0.0
    %193 = vmatprep.subr.mxu0 0.0
    %194 = vmatpush1.msra.mxu0 0.0
    %195 = vmatprep.subr.mxu0 0.0
    %196 = vmatpush1.msra.mxu0 0.0
    %197 = vmatprep.subr.mxu0 0.0
    %198 = vmatpush1.msra.mxu0 0.0
    %199 = vmatprep.subr.mxu0 0.0
    %200 = vmatpush1.msra.mxu0 0.0
    %201 = vmatprep.subr.mxu0 0.0
    %202 = vmatpush1.msra.mxu0 0.0
    %203 = vmatprep.subr.mxu0 0.0
    %204 = vmatpush1.msra.mxu0 0.0
    %205 = vmatprep.subr.mxu0 0.0
    %206 = vmatpush1.msra.mxu0 0.0
    %207 = vmatprep.subr.mxu0 0.0
    %208 = vmatpush1.msra.mxu0 0.0
    %209 = vmatprep.subr.mxu0 0.0
    %210 = vmatpush1.msra.mxu0 0.0
    %211 = vmatprep.subr.mxu0 0.0
    %212 = vmatpush1.msra.mxu0 0.0
    %213 = vmatprep.subr.mxu0 0.0
    %214 = vmatpush1.msra.mxu0 0.0
    %215 = vmatprep.mubr.f32.mxu0 0.0
    %216 = vmatmul.mubr.f32.gmra.mrb[0].mxu0 %v145
    %v217 = vpop.f32.mrb[0].mxu0
    %v218 = vadd.f32 0.0, %v217
    %v219 = vpop.f32.mrb[0].mxu0
    %220 = vdwg.mxu0
    %v221 = vxor.u32 %v218, 2147483648
    %v222 = vmul.f32 %v221, 1.442695
    %v223 = vpow.pop %v222
    %v224 = vadd.f32 %v223, 1.0
    %v225 = vrcp.pop %v224
    %v226 = vmul.f32 1.0, %v225
    %v227 = vlaneseq
    %v228 = vshrl.u32 %v227, 7
    %v229 = vsub.s32 0, %v228
    %v230 = vrot.slane %v226, %v229
    %232 = vbcast.lane.b32.xlu0 %v230, 256
    %v233 = vpop.permute.xlu0 %232
    %v234 = vlaneseq
    %v235 = vshrl.u32 %v234, 7
    %v236 = vsub.s32 1, %v235
    %v237 = vrot.slane %v226, %v236
    %239 = vbcast.lane.b32.xlu0 %v237, 256
    %v240 = vpop.permute.xlu0 %239
    %v244 = vunpack.c.l.s4 839922192
    %v245 = vunpack.c.0.s8 %v244
    %v246 = vlaneseq
    %v247 = vshrl.u32 %v246, 7
    %v248 = vsub.s32 %v245, %v247
    %v249 = vrot.slane %v233, %v248
    %v251 = vunpack.c.l.s4 839922192
    %v252 = vunpack.c.0.s8 %v251
    %v253 = vlaneseq
    %v254 = vshrl.u32 %v253, 7
    %v255 = vsub.s32 %v252, %v254
    %v256 = vrot.slane %v240, %v255
    %v259 = vmul.f32 %v29, %v249
    %v260 = vmul.f32 %v30, %v256
    %261 = vst [vmem:[#allocation5] sm:$0xff] %v259
    %262 = vst [vmem:[#allocation5 + $0x8] sm:$0xff] %v260
    // Predicated region
    $region18: #{tpu_custom_call.1} parent=1 // pred_check
      _
    $region19: #{tpu_custom_call.1} parent=1 // pred_check_branch
      %264 = sbr.rel (0) target = $region21
    $region20: #{tpu_custom_call.1} parent=1 // pred_region
      %s266 = ssub.s32 256, 256
      %267 = vsyncadd [#allocation4], %s266
      %s268 = sshll.u32 [#allocation5], 4
      %s269 = int_to_ptr.vmem [resolvable:$true] %s268
      %274 = dma.vmem_to_hbm [thread:$0]  %s269, 256, %s3, [#allocation4], 128, 128, 8
    $region21: #{tpu_custom_call.1} parent=1 // pred_fallthru
      _
    // Predicated region
    $region22: #{tpu_custom_call.1} parent=1 // pred_check
      _
    $region23: #{tpu_custom_call.1} parent=1 // pred_check_branch
      %276 = sbr.rel (0) target = $region25
    $region24: #{tpu_custom_call.1} parent=1 // pred_region
      %277 = dma.done [#allocation4], 256
    $region25: #{tpu_custom_call.1} parent=1 // pred_fallthru
      _
    %278 = vsyncpa [#allocation3], 1
    %279 = vsyncpa [#allocation4], 1

</llo_original>
